<compile_context>
chip_gen: v7x
topology: tpu7x:2x2x1
jax: 0.10.0
libtpu: 0.0.40
codegen_flags: <defaults>
</compile_context>

<pallas_src>
import functools

import jax
import jax.numpy as jnp
from jax.experimental import pallas as pl
from jax.experimental.pallas import tpu as pltpu


def _ff_norm_kernel(x_ref, w1_ref, b1_ref, w2_ref, b2_ref, o_ref, *,
                    n_per_sample):
    """One grid step = `batch_block` samples, fully fused FF + residual + norm."""
    rows, d = o_ref.shape            # rows = batch_block * N
    n = n_per_sample
    bb = rows // n

    x = x_ref[...]                   # (rows, d)  f32
    w1 = w1_ref[...]                 # (d, H)     f32 or bf16 (cast in wrapper)
    b1 = b1_ref[...]                 # (1, H)     f32
    w2 = w2_ref[...]                 # (H, d)     f32 or bf16
    b2 = b2_ref[...]                 # (1, d)     f32

    # Only the activation tiles are cast on-chip; the residual uses f32 x.
    xm = x.astype(w1.dtype) if w1.dtype != x.dtype else x
    h = jnp.dot(xm, w1, preferred_element_type=jnp.float32) + b1
    h = jnp.maximum(h, 0.0)                                   # ReLU (f32)
    hm = h.astype(w2.dtype) if w2.dtype != h.dtype else h
    y = jnp.dot(hm, w2, preferred_element_type=jnp.float32) + b2

    s = y + x                                                 # residual, f32
    s3 = s.reshape(bb, n, d)                                  # per-sample view

    cnt = n * d
    # Two-pass, unbiased (ddof=1) variance: lane reduce first, then the small
    # sublane reduce; avoids the cancellation of the one-pass formula.
    tot = jnp.sum(jnp.sum(s3, axis=2, keepdims=True), axis=1, keepdims=True)
    mean = tot * (1.0 / cnt)                                  # (bb, 1, 1)
    centered = s3 - mean
    sq = jnp.sum(jnp.sum(centered * centered, axis=2, keepdims=True),
                 axis=1, keepdims=True)
    var = sq * (1.0 / (cnt - 1))
    inv_std = jax.lax.rsqrt(var + 1e-5)                       # EUP rsqrt

    # Single lane/sublane-dense slab store for the whole block.
    o_ref[...] = (centered * inv_std).reshape(rows, d).astype(o_ref.dtype)


def ff_and_norm_sublayer(x, w1, b1, w2, b2, *, batch_block=None,
                         use_bf16_matmul=False, single_buffer_weights=False):
    """x: (B, N, D); w1: (D, H); b1: (H,); w2: (H, D); b2: (D,)."""
    B, N, D = x.shape
    H = w1.shape[1]

    if batch_block is None:
        # grid length >= 2 lets dimension_semantics=('parallel',) feed both
        # v7x TensorCores; costs only ~0.35 us/step on single-TC chips.
        if B % 2 == 0 and ((B // 2) * N) % 8 == 0:
            batch_block = B // 2
        else:
            batch_block = B
    assert B % batch_block == 0, "batch_block must divide B"
    rows = batch_block * N
    # (8, 128) rule: last-two block dims must divide (8, 128) or equal the
    # full array dims.
    assert rows % 8 == 0 or batch_block == B, (
        "batch_block*N must be a multiple of 8 (or batch_block == B)")
    grid_len = B // batch_block

    # Cast weights ONCE in the wrapper (not per grid step in the kernel):
    # halves weight DMA + resident VMEM.  Biases stay f32 (added to f32 acc).
    if use_bf16_matmul:
        w1 = w1.astype(jnp.bfloat16)
        w2 = w2.astype(jnp.bfloat16)
    wbytes = jnp.dtype(w1.dtype).itemsize

    x2 = x.reshape(B * N, D)                 # free metadata reshape
    b1_2d = b1.reshape(1, H).astype(jnp.float32)
    b2_2d = b2.reshape(1, D).astype(jnp.float32)

    # Grid-invariant weight/bias blocks; optionally single-buffered so constant
    # blocks are not double-buffered (halves their VMEM footprint on v7x).
    weight_kwargs = {}
    if single_buffer_weights and grid_len > 1:
        weight_kwargs = dict(pipeline_mode=pl.Buffered(1))

    # Explicit VMEM budget: double-buffered I/O blocks + f32 intermediates with
    # headroom, clamped so it is legal on every chip (v7x physical is 64 MiB).
    est = (2 * (rows * D * 4                         # x block
                + D * H * wbytes + H * 4             # W1, b1
                + H * D * wbytes + D * 4             # W2, b2
                + rows * D * 4)                      # out block
           + rows * H * 4 * 3                        # h (+ cast copy)
           + rows * D * 4 * 4)                       # y / s / centered / out
    vmem_limit = int(min(max(2 * est, 32 * 1024 * 1024), 56 * 1024 * 1024))

    kernel = functools.partial(_ff_norm_kernel, n_per_sample=N)

    out2 = pl.pallas_call(
        kernel,
        out_shape=jax.ShapeDtypeStruct((B * N, D), x.dtype),
        grid_spec=pl.GridSpec(
            grid=(grid_len,),
            in_specs=[
                # Activations: batch_block*N rows per step.
                pl.BlockSpec((rows, D), lambda i: (i, 0)),
                # Weights / biases: grid-invariant (resident across steps).
                pl.BlockSpec((D, H), lambda i: (0, 0), **weight_kwargs),
                pl.BlockSpec((1, H), lambda i: (0, 0), **weight_kwargs),
                pl.BlockSpec((H, D), lambda i: (0, 0), **weight_kwargs),
                pl.BlockSpec((1, D), lambda i: (0, 0), **weight_kwargs),
            ],
            out_specs=pl.BlockSpec((rows, D), lambda i: (i, 0)),
        ),
        compiler_params=pltpu.CompilerParams(
            dimension_semantics=("parallel",),
            vmem_limit_bytes=vmem_limit),
    )(x2, w1, b1_2d, w2, b2_2d)

    return out2.reshape(B, N, D)


def _reference(x, w1, b1, w2, b2, *, bf16_matmul=False):
    # Pure-JAX reference mirroring the PyTorch forward.
    if bf16_matmul:
        xm = x.astype(jnp.bfloat16)
        w1m = w1.astype(jnp.bfloat16)
        w2m = w2.astype(jnp.bfloat16)
    else:
        xm, w1m, w2m = x, w1, w2
    h = jnp.dot(xm, w1m, preferred_element_type=jnp.float32) + b1
    h = jnp.maximum(h, 0.0)
    if bf16_matmul:
        h = h.astype(jnp.bfloat16)
    y = jnp.dot(h, w2m, preferred_element_type=jnp.float32) + b2
    s = y + x
    mean = s.mean(axis=(1, 2), keepdims=True)
    var = s.var(axis=(1, 2), keepdims=True, ddof=1)   # unbiased, like torch.var
    return (s - mean) / jnp.sqrt(var + 1e-5)


if __name__ == "__main__":
    # Small shapes consistent with the module: batch=2, seq=8, embed_dim=32,
    # feed_forward_hidden=64.
    B, N, D, H = 2, 8, 32, 64

    key = jax.random.PRNGKey(0)
    kx, k1, k2, k3, k4 = jax.random.split(key, 5)

    x = jax.random.normal(kx, (B, N, D), dtype=jnp.float32)

    # Deterministic parameter init (PyTorch Linear-style uniform bounds).
    bound1 = 1.0 / (D ** 0.5)
    bound2 = 1.0 / (H ** 0.5)
    w1 = jax.random.uniform(k1, (D, H), jnp.float32, -bound1, bound1)
    b1 = jax.random.uniform(k2, (H,), jnp.float32, -bound1, bound1)
    w2 = jax.random.uniform(k3, (H, D), jnp.float32, -bound2, bound2)
    b2 = jax.random.uniform(k4, (D,), jnp.float32, -bound2, bound2)

    # f32 MXU path (default grid=(2,)): exact match to the PyTorch forward.
    out = jax.block_until_ready(ff_and_norm_sublayer(x, w1, b1, w2, b2))
    ref = _reference(x, w1, b1, w2, b2)
    assert out.shape == (B, N, D)
    assert jnp.allclose(out, ref, atol=2e-4, rtol=2e-4), "f32 mismatch vs reference"

    # bf16-on-MXU fast path (valid on v5e/v6e/v7x); weights cast in the wrapper.
    # Note: intentionally not bit-equivalent to the f32 module forward.
    out_bf16 = jax.block_until_ready(
        ff_and_norm_sublayer(x, w1, b1, w2, b2, use_bf16_matmul=True))
    ref_bf16 = _reference(x, w1, b1, w2, b2, bf16_matmul=True)
    assert jnp.allclose(out_bf16, ref_bf16, atol=2e-3, rtol=2e-3), \
        "bf16 mismatch vs bf16 reference"

    # Single fused grid step (batch_block = B) also supported.
    out_one = jax.block_until_ready(
        ff_and_norm_sublayer(x, w1, b1, w2, b2, batch_block=B))
    assert jnp.allclose(out_one, ref, atol=2e-4, rtol=2e-4), \
        "single-step mismatch vs reference"

    print("KERNEL_OK")
</pallas_src>

<mosaic_0001>
module attributes {stable_mosaic.version = 11 : i64} {
  func.func @_ff_norm_kernel(%arg0: i32, %arg1: memref<8x32xf32, #tpu.memory_space<vmem>>, %arg2: memref<32x64xf32, #tpu.memory_space<vmem>>, %arg3: memref<1x64xf32, #tpu.memory_space<vmem>>, %arg4: memref<64x32xf32, #tpu.memory_space<vmem>>, %arg5: memref<1x32xf32, #tpu.memory_space<vmem>>, %arg6: memref<8x32xf32, #tpu.memory_space<vmem>>) attributes {dimension_semantics = [#tpu.dimension_semantics<parallel>], iteration_bounds = array<i64: 2>, scalar_prefetch = 0 : i64, scratch_operands = 0 : i64, tpu.core_type = #tpu.core_type<tc>, window_params = [{transform_indices = @transform_0, window_bounds = array<i64: 8, 32>}, {pipeline_mode = #tpu.pipeline_mode<synchronous>, transform_indices = @transform_1, window_bounds = array<i64: 32, 64>}, {pipeline_mode = #tpu.pipeline_mode<synchronous>, transform_indices = @transform_2, window_bounds = array<i64: 1, 64>}, {pipeline_mode = #tpu.pipeline_mode<synchronous>, transform_indices = @transform_3, window_bounds = array<i64: 64, 32>}, {pipeline_mode = #tpu.pipeline_mode<synchronous>, transform_indices = @transform_4, window_bounds = array<i64: 1, 32>}, {transform_indices = @transform_5, window_bounds = array<i64: 8, 32>}]} {
    %c0 = arith.constant 0 : index
    %c0_0 = arith.constant 0 : index
    %0 = vector.load %arg1[%c0, %c0_0] : memref<8x32xf32, #tpu.memory_space<vmem>>, vector<8x32xf32>
    %c0_1 = arith.constant 0 : index
    %c0_2 = arith.constant 0 : index
    %1 = vector.load %arg2[%c0_1, %c0_2] : memref<32x64xf32, #tpu.memory_space<vmem>>, vector<32x64xf32>
    %c0_3 = arith.constant 0 : index
    %c0_4 = arith.constant 0 : index
    %2 = vector.load %arg3[%c0_3, %c0_4] : memref<1x64xf32, #tpu.memory_space<vmem>>, vector<1x64xf32>
    %c0_5 = arith.constant 0 : index
    %c0_6 = arith.constant 0 : index
    %3 = vector.load %arg4[%c0_5, %c0_6] : memref<64x32xf32, #tpu.memory_space<vmem>>, vector<64x32xf32>
    %c0_7 = arith.constant 0 : index
    %c0_8 = arith.constant 0 : index
    %4 = vector.load %arg5[%c0_7, %c0_8] : memref<1x32xf32, #tpu.memory_space<vmem>>, vector<1x32xf32>
    %cst = arith.constant dense<0.000000e+00> : vector<8x64xf32>
    %5 = tpu.matmul %0, %1, %cst {dimension_numbers = #tpu.dot_dimension_numbers<[1], [0], [0], [1], [0, 0, 1, 1], [], []>} : vector<8x32xf32>, vector<32x64xf32>, vector<8x64xf32> -> vector<8x64xf32>
    %6 = vector.broadcast %2 : vector<1x64xf32> to vector<8x64xf32>
    %7 = arith.addf %5, %6 : vector<8x64xf32>
    %cst_9 = arith.constant 0.000000e+00 : f32
    %8 = vector.broadcast %cst_9 : f32 to vector<8x64xf32>
    %9 = arith.maximumf %7, %8 : vector<8x64xf32>
    %cst_10 = arith.constant dense<0.000000e+00> : vector<8x32xf32>
    %10 = tpu.matmul %9, %3, %cst_10 {dimension_numbers = #tpu.dot_dimension_numbers<[1], [0], [0], [1], [0, 0, 1, 1], [], []>} : vector<8x64xf32>, vector<64x32xf32>, vector<8x32xf32> -> vector<8x32xf32>
    %11 = vector.broadcast %4 : vector<1x32xf32> to vector<8x32xf32>
    %12 = arith.addf %10, %11 : vector<8x32xf32>
    %13 = arith.addf %12, %0 : vector<8x32xf32>
    %14 = vector.shape_cast %13 : vector<8x32xf32> to vector<1x8x32xf32>
    %cst_11 = arith.constant dense<0.000000e+00> : vector<1x8xf32>
    %15 = vector.multi_reduction <add>, %14, %cst_11 [2] : vector<1x8x32xf32> to vector<1x8xf32>
    %16 = vector.shape_cast %15 : vector<1x8xf32> to vector<1x8x1xf32>
    %cst_12 = arith.constant dense<0.000000e+00> : vector<1x1xf32>
    %17 = vector.multi_reduction <add>, %16, %cst_12 [1] : vector<1x8x1xf32> to vector<1x1xf32>
    %18 = vector.shape_cast %17 : vector<1x1xf32> to vector<1x1x1xf32>
    %cst_13 = arith.constant 3.906250e-03 : f32
    %19 = vector.broadcast %cst_13 : f32 to vector<1x1x1xf32>
    %20 = arith.mulf %18, %19 : vector<1x1x1xf32>
    %21 = vector.broadcast %20 : vector<1x1x1xf32> to vector<1x8x32xf32>
    %22 = arith.subf %14, %21 : vector<1x8x32xf32>
    %23 = arith.mulf %22, %22 : vector<1x8x32xf32>
    %cst_14 = arith.constant dense<0.000000e+00> : vector<1x8xf32>
    %24 = vector.multi_reduction <add>, %23, %cst_14 [2] : vector<1x8x32xf32> to vector<1x8xf32>
    %25 = vector.shape_cast %24 : vector<1x8xf32> to vector<1x8x1xf32>
    %cst_15 = arith.constant dense<0.000000e+00> : vector<1x1xf32>
    %26 = vector.multi_reduction <add>, %25, %cst_15 [1] : vector<1x8x1xf32> to vector<1x1xf32>
    %27 = vector.shape_cast %26 : vector<1x1xf32> to vector<1x1x1xf32>
    %cst_16 = arith.constant 0.00392156886 : f32
    %28 = vector.broadcast %cst_16 : f32 to vector<1x1x1xf32>
    %29 = arith.mulf %27, %28 : vector<1x1x1xf32>
    %cst_17 = arith.constant 9.99999974E-6 : f32
    %30 = vector.broadcast %cst_17 : f32 to vector<1x1x1xf32>
    %31 = arith.addf %29, %30 : vector<1x1x1xf32>
    %32 = math.rsqrt %31 : vector<1x1x1xf32>
    %33 = vector.broadcast %32 : vector<1x1x1xf32> to vector<1x8x32xf32>
    %34 = arith.mulf %22, %33 : vector<1x8x32xf32>
    %35 = vector.shape_cast %34 : vector<1x8x32xf32> to vector<8x32xf32>
    %c0_18 = arith.constant 0 : index
    %c0_19 = arith.constant 0 : index
    %36 = vector.load %arg6[%c0_18, %c0_19] : memref<8x32xf32, #tpu.memory_space<vmem>>, vector<8x32xf32>
    tpu.vector_store %arg6[%c0_18, %c0_19], %35 {strides = array<i32>} : memref<8x32xf32, #tpu.memory_space<vmem>>, vector<8x32xf32>,
    return
  }
  func.func @transform_0(%arg0: i32) -> (i32, i32) {
    %c0_i32 = arith.constant 0 : i32
    %c0_i32_0 = arith.constant 0 : i32
    return %arg0, %c0_i32 : i32, i32
  }
  func.func @transform_1(%arg0: i32) -> (i32, i32) {
    %c0_i32 = arith.constant 0 : i32
    %c0_i32_0 = arith.constant 0 : i32
    %c0_i32_1 = arith.constant 0 : i32
    return %c0_i32, %c0_i32_0 : i32, i32
  }
  func.func @transform_2(%arg0: i32) -> (i32, i32) {
    %c0_i32 = arith.constant 0 : i32
    %c0_i32_0 = arith.constant 0 : i32
    %c0_i32_1 = arith.constant 0 : i32
    return %c0_i32, %c0_i32_0 : i32, i32
  }
  func.func @transform_3(%arg0: i32) -> (i32, i32) {
    %c0_i32 = arith.constant 0 : i32
    %c0_i32_0 = arith.constant 0 : i32
    %c0_i32_1 = arith.constant 0 : i32
    return %c0_i32, %c0_i32_0 : i32, i32
  }
  func.func @transform_4(%arg0: i32) -> (i32, i32) {
    %c0_i32 = arith.constant 0 : i32
    %c0_i32_0 = arith.constant 0 : i32
    %c0_i32_1 = arith.constant 0 : i32
    return %c0_i32, %c0_i32_0 : i32, i32
  }
  func.func @transform_5(%arg0: i32) -> (i32, i32) {
    %c0_i32 = arith.constant 0 : i32
    %c0_i32_0 = arith.constant 0 : i32
    return %arg0, %c0_i32 : i32, i32
  }
}

</mosaic_0001>

<llo_original>
// kernel: tpu_custom_call.1
$region0: #{tpu_custom_call.1}
  #allocation0 [shape = 'u32[]', space=smem, size = 0x4, offset = 0x4, fixed_abs, tag = 'smem constant byte address 0x4 - core index']
  #allocation1 [shape = 'u32[144,128]{1,0:T(1,128)}', space=vmem, size = 0x12000, scoped, tag = 'internal scratch']
  %s0 = inlined_call_operand.vmem [shape: f32[16,32], index: 0, kind: input, shape index: {}]
  %s1 = inlined_call_operand.vmem [shape: f32[32,64], index: 1, kind: input, shape index: {}]
  %s2 = inlined_call_operand.vmem [shape: f32[1,64], index: 2, kind: input, shape index: {}]
  %s3 = inlined_call_operand.vmem [shape: f32[64,32], index: 3, kind: input, shape index: {}]
  %s4 = inlined_call_operand.vmem [shape: f32[1,32], index: 4, kind: input, shape index: {}]
  %s5 = inlined_call_operand.hbm [shape: f32[16,32], index: 5, kind: output, shape index: {}]
  %s6 = sld [smem:[#allocation0]]
  $region53: #{tpu_custom_call.1} parent=0
    _
  %s8 = ssub.s32 1, %s6
  %s9 = scalar_select 0, %s8, %s6
  $region1: #{tpu_custom_call.1} parent=0
    #allocation2 [shape = 'u8[8192]{0}', space=vmem, size = 0x2000, scoped, tag = 'output window, operand 0']
    #allocation3 [shape = 's32[2]{0}', space=sflag, size = 0x8, scoped, tag = 'scoped memory for tpu_custom_call.1']
    %10 = vsyncpa [#allocation3], 0
    %s11 = scalar_lea.sflag [#allocation3], 1
    %12 = vsyncpa %s11, 0
    loop: start=0, step=1, limit=4
    $region2: #{tpu_custom_call.1} parent=1 // loop_pre_header
      _
    $region3: #{tpu_custom_call.1} parent=1 // loop_header
      %s14 = sphi 0, %s18
      %p15 = scmp.ge.s32.totalorder %s14, 4
      %s24 = sphi 0, %s26
      %s27 = sphi 0, %s24
      %s28 = sphi 0, %s27
      %s44 = sphi 0, %s28
      %s48 = sphi 0, %s48
      %s50 = sphi 0, %s48
      %s51 = sphi 0, %s50
      %s65 = sphi 0, %s51
      %s69 = sphi 0, %s69
      %s71 = sphi 0, %s69
      %s72 = sphi 0, %s71
      %s86 = sphi 0, %s72
      %s90 = sphi 0, %s90
      %s92 = sphi 0, %s90
      %s93 = sphi 0, %s92
      %s107 = sphi 0, %s93
      %s111 = sphi 0, %s111
      %s113 = sphi 0, %s111
      %s114 = sphi 0, %s113
      %s128 = sphi 0, %s114
      %s134 = sphi 0, %s136
      %s137 = sphi 0, %s134
      %s138 = sphi 0, %s137
      %s154 = sphi 0, %s138
    $region4: #{tpu_custom_call.1} parent=1 // loop_header_branch
      %17 = sbr.rel (%p15) target = $region8
    $region5: #{tpu_custom_call.1} parent=1 // loop_body
      %s19 = ssub.s32 %s14, 1
      %s20 = ssub.s32 %s14, 2
      %s21 = sadd.s32 %s14, 1
      %s22 = ssub.s32 %s14, %s21
      %p23 = scmp.eq.s32.totalorder %s22, 0
      %s25 = sadd.s32 %s24, 1
      %s26 = scalar_select %p23, %s24, %s25
      %p29 = pneg %p23
      %p30 = scmp.eq.s32.totalorder %s14, 1
      %p31 = por %p29, %p30
      %p32 = scmp.ne.s32.totalorder %s24, %s27
      %p33 = scmp.eq.s32.totalorder %s14, 0
      %p34 = por %p32, %p33
      %p35 = scmp.ne.s32.totalorder %s24, %s27
      %p36 = scmp.eq.s32.totalorder %s19, 1
      %p37 = por %p35, %p36
      %p38 = scmp.ne.s32.totalorder %s27, %s28
      %p39 = scmp.eq.s32.totalorder %s19, 0
      %p40 = por %p38, %p39
      %p41 = scmp.ne.s32.totalorder %s27, %s28
      %p42 = scmp.eq.s32.totalorder %s20, 1
      %p43 = por %p41, %p42
      %p45 = scmp.ne.s32.totalorder %s28, %s44
      %p46 = scmp.eq.s32.totalorder %s20, 0
      %p47 = por %p45, %p46
      %s49 = sadd.s32 %s48, 1
      %p52 = scmp.eq.s32.totalorder %s14, 1
      %p53 = scmp.ne.s32.totalorder %s48, %s50
      %p54 = scmp.eq.s32.totalorder %s14, 0
      %p55 = por %p53, %p54
      %p56 = scmp.ne.s32.totalorder %s48, %s50
      %p57 = scmp.eq.s32.totalorder %s19, 1
      %p58 = por %p56, %p57
      %p59 = scmp.ne.s32.totalorder %s50, %s51
      %p60 = scmp.eq.s32.totalorder %s19, 0
      %p61 = por %p59, %p60
      %p62 = scmp.ne.s32.totalorder %s50, %s51
      %p63 = scmp.eq.s32.totalorder %s20, 1
      %p64 = por %p62, %p63
      %p66 = scmp.ne.s32.totalorder %s51, %s65
      %p67 = scmp.eq.s32.totalorder %s20, 0
      %p68 = por %p66, %p67
      %s70 = sadd.s32 %s69, 1
      %p73 = scmp.eq.s32.totalorder %s14, 1
      %p74 = scmp.ne.s32.totalorder %s69, %s71
      %p75 = scmp.eq.s32.totalorder %s14, 0
      %p76 = por %p74, %p75
      %p77 = scmp.ne.s32.totalorder %s69, %s71
      %p78 = scmp.eq.s32.totalorder %s19, 1
      %p79 = por %p77, %p78
      %p80 = scmp.ne.s32.totalorder %s71, %s72
      %p81 = scmp.eq.s32.totalorder %s19, 0
      %p82 = por %p80, %p81
      %p83 = scmp.ne.s32.totalorder %s71, %s72
      %p84 = scmp.eq.s32.totalorder %s20, 1
      %p85 = por %p83, %p84
      %p87 = scmp.ne.s32.totalorder %s72, %s86
      %p88 = scmp.eq.s32.totalorder %s20, 0
      %p89 = por %p87, %p88
      %s91 = sadd.s32 %s90, 1
      %p94 = scmp.eq.s32.totalorder %s14, 1
      %p95 = scmp.ne.s32.totalorder %s90, %s92
      %p96 = scmp.eq.s32.totalorder %s14, 0
      %p97 = por %p95, %p96
      %p98 = scmp.ne.s32.totalorder %s90, %s92
      %p99 = scmp.eq.s32.totalorder %s19, 1
      %p100 = por %p98, %p99
      %p101 = scmp.ne.s32.totalorder %s92, %s93
      %p102 = scmp.eq.s32.totalorder %s19, 0
      %p103 = por %p101, %p102
      %p104 = scmp.ne.s32.totalorder %s92, %s93
      %p105 = scmp.eq.s32.totalorder %s20, 1
      %p106 = por %p104, %p105
      %p108 = scmp.ne.s32.totalorder %s93, %s107
      %p109 = scmp.eq.s32.totalorder %s20, 0
      %p110 = por %p108, %p109
      %s112 = sadd.s32 %s111, 1
      %p115 = scmp.eq.s32.totalorder %s14, 1
      %p116 = scmp.ne.s32.totalorder %s111, %s113
      %p117 = scmp.eq.s32.totalorder %s14, 0
      %p118 = por %p116, %p117
      %p119 = scmp.ne.s32.totalorder %s111, %s113
      %p120 = scmp.eq.s32.totalorder %s19, 1
      %p121 = por %p119, %p120
      %p122 = scmp.ne.s32.totalorder %s113, %s114
      %p123 = scmp.eq.s32.totalorder %s19, 0
      %p124 = por %p122, %p123
      %p125 = scmp.ne.s32.totalorder %s113, %s114
      %p126 = scmp.eq.s32.totalorder %s20, 1
      %p127 = por %p125, %p126
      %p129 = scmp.ne.s32.totalorder %s114, %s128
      %p130 = scmp.eq.s32.totalorder %s20, 0
      %p131 = por %p129, %p130
      %s132 = ssub.s32 %s14, %s21
      %p133 = scmp.eq.s32.totalorder %s132, 0
      %s135 = sadd.s32 %s134, 1
      %s136 = scalar_select %p133, %s134, %s135
      %p139 = pneg %p133
      %p140 = scmp.eq.s32.totalorder %s14, 1
      %p141 = por %p139, %p140
      %p142 = scmp.ne.s32.totalorder %s134, %s137
      %p143 = scmp.eq.s32.totalorder %s14, 0
      %p144 = por %p142, %p143
      %p145 = scmp.ne.s32.totalorder %s134, %s137
      %p146 = scmp.eq.s32.totalorder %s19, 1
      %p147 = por %p145, %p146
      %p148 = scmp.ne.s32.totalorder %s137, %s138
      %p149 = scmp.eq.s32.totalorder %s19, 0
      %p150 = por %p148, %p149
      %p151 = scmp.ne.s32.totalorder %s137, %s138
      %p152 = scmp.eq.s32.totalorder %s20, 1
      %p153 = por %p151, %p152
      %p155 = scmp.ne.s32.totalorder %s138, %s154
      %p156 = scmp.eq.s32.totalorder %s20, 0
      %p157 = por %p155, %p156
      %p158 = scmp.le.s32.totalorder 1, %s14
      %p159 = scmp.lt.s32.totalorder %s14, 3
      %p160 = pnand %p158, %p159
      %p161 = pneg %p160
      // Predicated region
      $region9: #{tpu_custom_call.1} parent=5 // pred_check
        _
      $region10: #{tpu_custom_call.1} parent=5 // pred_check_branch
        %163 = sbr.rel (%p160) target = $region12
      $region11: #{tpu_custom_call.1} parent=5 // pred_region
        %s164 = ssub.s32 %s14, 1
        // Predicated region
        $region13: #{tpu_custom_call.1} parent=11 // pred_check
          %p165 = pneg %p61
        $region14: #{tpu_custom_call.1} parent=11 // pred_check_branch
          %167 = sbr.rel (%p165) target = $region16
        $region15: #{tpu_custom_call.1} parent=11 // pred_region
          _
        $region16: #{tpu_custom_call.1} parent=11 // pred_fallthru
          _
        // Predicated region
        $region17: #{tpu_custom_call.1} parent=11 // pred_check
          %p168 = pneg %p82
        $region18: #{tpu_custom_call.1} parent=11 // pred_check_branch
          %170 = sbr.rel (%p168) target = $region20
        $region19: #{tpu_custom_call.1} parent=11 // pred_region
          _
        $region20: #{tpu_custom_call.1} parent=11 // pred_fallthru
          _
        // Predicated region
        $region21: #{tpu_custom_call.1} parent=11 // pred_check
          %p171 = pneg %p103
        $region22: #{tpu_custom_call.1} parent=11 // pred_check_branch
          %173 = sbr.rel (%p171) target = $region24
        $region23: #{tpu_custom_call.1} parent=11 // pred_region
          _
        $region24: #{tpu_custom_call.1} parent=11 // pred_fallthru
          _
        // Predicated region
        $region25: #{tpu_custom_call.1} parent=11 // pred_check
          %p174 = pneg %p124
        $region26: #{tpu_custom_call.1} parent=11 // pred_check_branch
          %176 = sbr.rel (%p174) target = $region28
        $region27: #{tpu_custom_call.1} parent=11 // pred_region
          _
        $region28: #{tpu_custom_call.1} parent=11 // pred_fallthru
          _
      $region12: #{tpu_custom_call.1} parent=5 // pred_fallthru
        _
      %p177 = scmp.lt.s32.totalorder %s14, 2
      // Predicated region
      $region29: #{tpu_custom_call.1} parent=5 // pred_check
        %p178 = pneg %p177
      $region30: #{tpu_custom_call.1} parent=5 // pred_check_branch
        %180 = sbr.rel (%p178) target = $region32
      $region31: #{tpu_custom_call.1} parent=5 // pred_region
        // Predicated region
        $region33: #{tpu_custom_call.1} parent=31 // pred_check
          %p181 = pneg %p34
        $region34: #{tpu_custom_call.1} parent=31 // pred_check_branch
          %183 = sbr.rel (%p181) target = $region36
        $region35: #{tpu_custom_call.1} parent=31 // pred_region
          %p184 = scmp.lt.s32.totalorder %s14, 1
          %s185 = scalar_select %p184, %s14, 1
          %s186 = smul.addr %s185, 8
          %s187 = scalar_lea.vmem %s0, %s186
        $region36: #{tpu_custom_call.1} parent=31 // pred_fallthru
          _
      $region32: #{tpu_custom_call.1} parent=5 // pred_fallthru
        _
      %p188 = scmp.le.s32.totalorder 1, %s14
      %p189 = scmp.lt.s32.totalorder %s14, 3
      %p190 = pnand %p188, %p189
      %p191 = pneg %p190
      // Predicated region
      $region37: #{tpu_custom_call.1} parent=5 // pred_check
        _
      $region38: #{tpu_custom_call.1} parent=5 // pred_check_branch
        %193 = sbr.rel (%p190) target = $region40
      $region39: #{tpu_custom_call.1} parent=5 // pred_region
        %s194 = ssub.s32 %s14, 1
        %p195 = scmp.lt.s32.totalorder %s19, 1
        %s196 = scalar_select %p195, %s19, 1
        %s197 = smul.addr %s196, 8
        %s198 = scalar_lea.vmem %s0, %s197
        %p199 = pneg %p40
        %p200 = pneg %p37
        %p201 = pneg %p61
        %p202 = pneg %p58
        %p203 = pneg %p82
        %p204 = pneg %p79
        %p205 = pneg %p103
        %p206 = pneg %p100
        %p207 = pneg %p124
        %p208 = pneg %p121
        %p209 = pneg %p150
        %p210 = pneg %p147
        %s211 = sand.u32 %s137, 1
        %s212 = scalar_lea.sflag [#allocation3], %s211
        %s213 = sand.u32 %s137, 1
        %s214 = smul.addr %s213, 8
        %s215 = scalar_lea.vmem [#allocation2], %s214
        %p216 = scmp.lt.s32.totalorder %s19, 1
        %s217 = scalar_select %p216, %s19, 1
        %s218 = smul.addr %s217, 8
        %s219 = scalar_lea.vmem %s0, %s218
        %v220 = vld [vmem:[%s219] sm:$0xff]
        %v221 = vld [vmem:[%s1] sm:$0xff]
        %v222 = vld [vmem:[%s1 + $0x8] sm:$0xff]
        %v223 = vld [vmem:[%s1 + $0x10] sm:$0xff]
        %v224 = vld [vmem:[%s1 + $0x18] sm:$0xff]
        %v225 = vld [vmem:[%s2] sm:$0x1]
        %v226 = vld [vmem:[%s3] sm:$0xff]
        %v227 = vld [vmem:[%s3 + $0x8] sm:$0xff]
        %v228 = vld [vmem:[%s3 + $0x10] sm:$0xff]
        %v229 = vld [vmem:[%s3 + $0x18] sm:$0xff]
        %v230 = vld [vmem:[%s3 + $0x20] sm:$0xff]
        %v231 = vld [vmem:[%s3 + $0x28] sm:$0xff]
        %v232 = vld [vmem:[%s3 + $0x30] sm:$0xff]
        %v233 = vld [vmem:[%s3 + $0x38] sm:$0xff]
        %v234 = vld [vmem:[%s4] sm:$0x1]
        %v236 = vlaneseq
        %v237 = vshrl.u32 %v236, 7
        %v238 = vsub.s32 0, %v237
        %v239 = vrot.slane %v225, %v238
        %vm241 = vcmask 261120
        %v243 = vsel %vm241, %v220, 0
        %245 = vmatprep.subr.mxu0 0.0
        %246 = vmatpush1.msra.mxu0 %v221
        %247 = vmatprep.subr.mxu0 0.0
        %248 = vmatpush1.msra.mxu0 %v222
        %249 = vmatprep.subr.mxu0 0.0
        %250 = vmatpush1.msra.mxu0 %v223
        %251 = vmatprep.subr.mxu0 0.0
        %252 = vmatpush1.msra.mxu0 %v224
        %253 = vmatprep.subr.mxu0 0.0
        %254 = vmatpush1.msra.mxu0 0.0
        %255 = vmatprep.subr.mxu0 0.0
        %256 = vmatpush1.msra.mxu0 0.0
        %257 = vmatprep.subr.mxu0 0.0
        %258 = vmatpush1.msra.mxu0 0.0
        %259 = vmatprep.subr.mxu0 0.0
        %260 = vmatpush1.msra.mxu0 0.0
        %261 = vmatprep.subr.mxu0 0.0
        %262 = vmatpush1.msra.mxu0 0.0
        %263 = vmatprep.subr.mxu0 0.0
        %264 = vmatpush1.msra.mxu0 0.0
        %265 = vmatprep.subr.mxu0 0.0
        %266 = vmatpush1.msra.mxu0 0.0
        %267 = vmatprep.subr.mxu0 0.0
        %268 = vmatpush1.msra.mxu0 0.0
        %269 = vmatprep.subr.mxu0 0.0
        %270 = vmatpush1.msra.mxu0 0.0
        %271 = vmatprep.subr.mxu0 0.0
        %272 = vmatpush1.msra.mxu0 0.0
        %273 = vmatprep.subr.mxu0 0.0
        %274 = vmatpush1.msra.mxu0 0.0
        %275 = vmatprep.subr.mxu0 0.0
        %276 = vmatpush1.msra.mxu0 0.0
        %277 = vmatprep.subr.mxu0 0.0
        %278 = vmatpush1.msra.mxu0 0.0
        %279 = vmatprep.subr.mxu0 0.0
        %280 = vmatpush1.msra.mxu0 0.0
        %281 = vmatprep.subr.mxu0 0.0
        %282 = vmatpush1.msra.mxu0 0.0
        %283 = vmatprep.subr.mxu0 0.0
        %284 = vmatpush1.msra.mxu0 0.0
        %285 = vmatprep.subr.mxu0 0.0
        %286 = vmatpush1.msra.mxu0 0.0
        %287 = vmatprep.subr.mxu0 0.0
        %288 = vmatpush1.msra.mxu0 0.0
        %289 = vmatprep.subr.mxu0 0.0
        %290 = vmatpush1.msra.mxu0 0.0
        %291 = vmatprep.subr.mxu0 0.0
        %292 = vmatpush1.msra.mxu0 0.0
        %293 = vmatprep.subr.mxu0 0.0
        %294 = vmatpush1.msra.mxu0 0.0
        %295 = vmatprep.subr.mxu0 0.0
        %296 = vmatpush1.msra.mxu0 0.0
        %297 = vmatprep.subr.mxu0 0.0
        %298 = vmatpush1.msra.mxu0 0.0
        %299 = vmatprep.subr.mxu0 0.0
        %300 = vmatpush1.msra.mxu0 0.0
        %301 = vmatprep.subr.mxu0 0.0
        %302 = vmatpush1.msra.mxu0 0.0
        %303 = vmatprep.subr.mxu0 0.0
        %304 = vmatpush1.msra.mxu0 0.0
        %305 = vmatprep.subr.mxu0 0.0
        %306 = vmatpush1.msra.mxu0 0.0
        %307 = vmatprep.subr.mxu0 0.0
        %308 = vmatpush1.msra.mxu0 0.0
        %309 = vmatprep.mubr.f32.mxu0 0.0
        %310 = vmatmul.mubr.f32.gmra.mrb[0].mxu0 %v243
        %v311 = vpop.f32.mrb[0].mxu0
        %v312 = vadd.f32 %v239, %v311
        %v313 = vpop.f32.mrb[0].mxu0
        %314 = vdwg.mxu0
        %v315 = vmax.f32 %v312, 0.0
        %v317 = vlaneseq
        %v318 = vshrl.u32 %v317, 7
        %v319 = vsub.s32 0, %v318
        %v320 = vrot.slane %v234, %v319
        %vm322 = vcmask 523264
        %v324 = vsel %vm322, %v315, 0
        %326 = vmatprep.subr.mxu0 0.0
        %327 = vmatpush1.msra.mxu0 %v226
        %328 = vmatprep.subr.mxu0 0.0
        %329 = vmatpush1.msra.mxu0 %v227
        %330 = vmatprep.subr.mxu0 0.0
        %331 = vmatpush1.msra.mxu0 %v228
        %332 = vmatprep.subr.mxu0 0.0
        %333 = vmatpush1.msra.mxu0 %v229
        %334 = vmatprep.subr.mxu0 0.0
        %335 = vmatpush1.msra.mxu0 %v230
        %336 = vmatprep.subr.mxu0 0.0
        %337 = vmatpush1.msra.mxu0 %v231
        %338 = vmatprep.subr.mxu0 0.0
        %339 = vmatpush1.msra.mxu0 %v232
        %340 = vmatprep.subr.mxu0 0.0
        %341 = vmatpush1.msra.mxu0 %v233
        %342 = vmatprep.subr.mxu0 0.0
        %343 = vmatpush1.msra.mxu0 0.0
        %344 = vmatprep.subr.mxu0 0.0
        %345 = vmatpush1.msra.mxu0 0.0
        %346 = vmatprep.subr.mxu0 0.0
        %347 = vmatpush1.msra.mxu0 0.0
        %348 = vmatprep.subr.mxu0 0.0
        %349 = vmatpush1.msra.mxu0 0.0
        %350 = vmatprep.subr.mxu0 0.0
        %351 = vmatpush1.msra.mxu0 0.0
        %352 = vmatprep.subr.mxu0 0.0
        %353 = vmatpush1.msra.mxu0 0.0
        %354 = vmatprep.subr.mxu0 0.0
        %355 = vmatpush1.msra.mxu0 0.0
        %356 = vmatprep.subr.mxu0 0.0
        %357 = vmatpush1.msra.mxu0 0.0
        %358 = vmatprep.subr.mxu0 0.0
        %359 = vmatpush1.msra.mxu0 0.0
        %360 = vmatprep.subr.mxu0 0.0
        %361 = vmatpush1.msra.mxu0 0.0
        %362 = vmatprep.subr.mxu0 0.0
        %363 = vmatpush1.msra.mxu0 0.0
        %364 = vmatprep.subr.mxu0 0.0
        %365 = vmatpush1.msra.mxu0 0.0
        %366 = vmatprep.subr.mxu0 0.0
        %367 = vmatpush1.msra.mxu0 0.0
        %368 = vmatprep.subr.mxu0 0.0
        %369 = vmatpush1.msra.mxu0 0.0
        %370 = vmatprep.subr.mxu0 0.0
        %371 = vmatpush1.msra.mxu0 0.0
        %372 = vmatprep.subr.mxu0 0.0
        %373 = vmatpush1.msra.mxu0 0.0
        %374 = vmatprep.subr.mxu0 0.0
        %375 = vmatpush1.msra.mxu0 0.0
        %376 = vmatprep.subr.mxu0 0.0
        %377 = vmatpush1.msra.mxu0 0.0
        %378 = vmatprep.subr.mxu0 0.0
        %379 = vmatpush1.msra.mxu0 0.0
        %380 = vmatprep.subr.mxu0 0.0
        %381 = vmatpush1.msra.mxu0 0.0
        %382 = vmatprep.subr.mxu0 0.0
        %383 = vmatpush1.msra.mxu0 0.0
        %384 = vmatprep.subr.mxu0 0.0
        %385 = vmatpush1.msra.mxu0 0.0
        %386 = vmatprep.subr.mxu0 0.0
        %387 = vmatpush1.msra.mxu0 0.0
        %388 = vmatprep.subr.mxu0 0.0
        %389 = vmatpush1.msra.mxu0 0.0
        %390 = vmatprep.mubr.f32.mxu0 0.0
        %391 = vmatmul.mubr.f32.gmra.mrb[0].mxu0 %v324
        %v392 = vpop.f32.mrb[0].mxu0
        %v393 = vadd.f32 %v320, %v392
        %v394 = vpop.f32.mrb[0].mxu0
        %395 = vdwg.mxu0
        %v396 = vadd.f32 %v393, %v220
        %v397 = vsel %vm241, %v396, 0.0
        %398 = vadd.xlane.f32.xlu0 %v397
        %v399 = vpop.xlane.xlu0 %398
        %v400 = vrot.slane %v399, 4
        %v401 = vadd.f32 %v399, %v400
        %v402 = vrot.slane %v401, 2
        %v403 = vadd.f32 %v401, %v402
        %v404 = vrot.slane %v403, 1
        %v405 = vadd.f32 %v403, %v404
        %v406 = vmul.f32 %v405, 0.00390625
        %v407 = vsub.f32 %v396, %v406
        %v408 = vmul.f32 %v407, %v407
        %v409 = vsel %vm241, %v408, 0.0
        %410 = vadd.xlane.f32.xlu0 %v409
        %v411 = vpop.xlane.xlu0 %410
        %v412 = vrot.slane %v411, 4
        %v413 = vadd.f32 %v411, %v412
        %v414 = vrot.slane %v413, 2
        %v415 = vadd.f32 %v413, %v414
        %v416 = vrot.slane %v415, 1
        %v417 = vadd.f32 %v415, %v416
        %v418 = vmul.f32 %v417, 0.003921569
        %v419 = vadd.f32 %v418, 1e-05
        %v420 = vrsqrt.pop %v419
        %v421 = vmul.f32 %v407, %v420
        %422 = vst.msk [vmem:[%s215] sm:$0xff] %vm241, %v421
        %s423 = sand.u32 %s137, 1
        %s424 = scalar_lea.sflag [#allocation3], %s423
        %s425 = sand.u32 %s137, 1
        %s426 = smul.addr %s425, 8
        %s427 = scalar_lea.vmem [#allocation2], %s426
        // Predicated region
        $region41: #{tpu_custom_call.1} parent=39 // pred_check
          %p428 = pneg %p147
        $region42: #{tpu_custom_call.1} parent=39 // pred_check_branch
          %430 = sbr.rel (%p428) target = $region44
        $region43: #{tpu_custom_call.1} parent=39 // pred_region
          %s432 = ssub.s32 128, 128
          %433 = vsyncadd %s424, %s432
          %s434 = smul.addr %s19, 128
          %s435 = scalar_lea.hbm %s5, %s434
          %s437 = sshll.u32 %s427, 4
          %s438 = int_to_ptr.vmem [resolvable:$true] %s437
          %440 = dma.vmem_to_hbm [thread:$0]  %s438, 128, %s435, %s424
        $region44: #{tpu_custom_call.1} parent=39 // pred_fallthru
          _
      $region40: #{tpu_custom_call.1} parent=5 // pred_fallthru
        _
      %p441 = scmp.le.s32.totalorder 2, %s14
      // Predicated region
      $region45: #{tpu_custom_call.1} parent=5 // pred_check
        %p442 = pneg %p441
      $region46: #{tpu_custom_call.1} parent=5 // pred_check_branch
        %444 = sbr.rel (%p442) target = $region48
      $region47: #{tpu_custom_call.1} parent=5 // pred_region
        %s445 = ssub.s32 %s14, 2
        // Predicated region
        $region49: #{tpu_custom_call.1} parent=47 // pred_check
          %p446 = pneg %p153
        $region50: #{tpu_custom_call.1} parent=47 // pred_check_branch
          %448 = sbr.rel (%p446) target = $region52
        $region51: #{tpu_custom_call.1} parent=47 // pred_region
          %s449 = sand.u32 %s138, 1
          %s450 = scalar_lea.sflag [#allocation3], %s449
          %s451 = sand.u32 %s138, 1
          %s452 = smul.addr %s451, 8
          %s453 = scalar_lea.vmem [#allocation2], %s452
          %454 = dma.done %s450, 128
        $region52: #{tpu_custom_call.1} parent=47 // pred_fallthru
          _
      $region48: #{tpu_custom_call.1} parent=5 // pred_fallthru
        _
    $region6: #{tpu_custom_call.1} parent=1 // loop_footer
      %s18 = sadd.s32 1, %s14
    $region7: #{tpu_custom_call.1} parent=1 // loop_footer_branch
      %13 = sbr.rel target = $region3
    $region8: #{tpu_custom_call.1} parent=1 // loop_exit
      _
    %455 = vsyncpa [#allocation3], 1
    %s456 = scalar_lea.sflag [#allocation3], 1
    %457 = vsyncpa %s456, 1

</llo_original>
